<compile_context>
chip_gen: v7x
topology: tpu7x:2x2x1
jax: 0.10.0
libtpu: 0.0.40
codegen_flags: <defaults>
</compile_context>

<pallas_src>
import functools
import math

import jax
import jax.numpy as jnp
import numpy as np
from jax import lax
from jax.experimental import pallas as pl
from jax.experimental.pallas import tpu as pltpu


def _round_up(x, m):
    return ((x + m - 1) // m) * m


def _vmem_limit_bytes():
    """Generation-aware scoped-VMEM cap: ~half physical (v5e/v6e -> 64 MiB,
    v7x -> 32 MiB); falls back to the universally safe 32 MiB."""
    try:
        cap = pltpu.get_tpu_info().vmem_capacity_bytes
        return int(min(cap // 2, 64 * 1024 * 1024))
    except Exception:
        return 32 * 1024 * 1024


def _dsc2d_kernel(src_ref, dw_ref, pw_ref, *rest,
                  row_start, col_off, C, OC, KK, Lt, chunk, use_mxu, has_bias):
    """One batch element per grid step.

    src_ref: (1, R, S)  zero-padded input, flat spatial LAST (lane axis).
             stride==1: R=C,    taps are static lane-offset slices (in-kernel windowing).
             stride>1 : R=KK*C, taps are row-offset slices (pre-decimated in wrapper).
    dw_ref : (KK, C, 1)  depthwise weights as per-(tap,channel) columns
    pw_ref : (C, OC, 1)  pointwise 1x1 weights as per-channel columns
    b_ref  : (OC, 1)     bias (operand present only when has_bias)
    o_ref  : (1, OC, Lt) output, lane-dense (Lt is a multiple of 128)
    """
    if has_bias:
        b_ref, o_ref = rest
    else:
        (o_ref,) = rest

    # Weight casts hoisted once per grid step, outside the tap / chunk loops.
    dwf = dw_ref[...].astype(jnp.float32)            # (KK, C, 1)
    pwf = pw_ref[...].astype(jnp.float32)            # (C, OC, 1)
    bf = b_ref[...].astype(jnp.float32) if has_bias else None

    # Column-chunked so the live f32 accumulator never spills the vreg file
    # (review: cap/stage the (C, Lt) accumulator, esp. on the MXU path).
    for j0 in range(0, Lt, chunk):
        cw = min(chunk, Lt - j0)                     # static; multiple of 128

        # ---- depthwise: KK lane-dense VPU FMAs, two partial accumulators ----
        parts = [None, None]
        for t in range(KK):
            r0 = row_start[t]
            c0 = col_off[t] + j0
            tap = src_ref[0, r0:r0 + C, c0:c0 + cw].astype(jnp.float32) * dwf[t]
            s = t & 1
            parts[s] = tap if parts[s] is None else parts[s] + tap
        acc = parts[0] if parts[1] is None else parts[0] + parts[1]   # (C, cw)

        # ---- pointwise 1x1 conv ----
        if use_mxu:
            # Mid/large channels: channel contraction on the MXU, f32 in / f32
            # accumulate (no bf16 round-trip -> matches the f32 reference).
            out = lax.dot_general(
                pwf[:, :, 0], acc,
                dimension_numbers=(((0,), (0,)), ((), ())),
                preferred_element_type=jnp.float32)                   # (OC, cw)
        else:
            # Tiny channels: unrolled VPU FMAs over C (two partial accumulators).
            pparts = [None, None]
            for c in range(C):
                term = pwf[c] * acc[c:c + 1, :]                       # (OC,1)*(1,cw)
                s = c & 1
                pparts[s] = term if pparts[s] is None else pparts[s] + term
            out = pparts[0] if pparts[1] is None else pparts[0] + pparts[1]

        if has_bias:
            out = out + bf                                            # (OC,1) bcast

        # Lane-dense, 128-aligned store -> unmasked vst.
        o_ref[0, :, j0:j0 + cw] = out.astype(o_ref.dtype)


def dsc2d_pallas(x, dw_w, pw_w, pw_b=None, *, stride=1, padding=1):
    """x: (N,C,H,W) NCHW; dw_w: (C,1,K,K); pw_w: (OC,C,1,1); pw_b: (OC,) or None."""
    N, C, H, W = x.shape
    OC = pw_w.shape[0]
    K = dw_w.shape[-1]
    KK = K * K
    Hp, Wp = H + 2 * padding, W + 2 * padding
    Ho = (Hp - K) // stride + 1
    Wo = (Wp - K) // stride + 1

    x_pad = jnp.pad(x, ((0, 0), (0, 0), (padding, padding), (padding, padding)))

    if stride == 1:
        # In-kernel windowing: tap (kh,kw) is a lane-offset slice of the flat
        # padded image (reads ~1x the input instead of KK materialized copies).
        Lt = _round_up(Ho * Wp, 128)                 # lane-dense, padded coords
        col_off = tuple(kh * Wp + kw for kh in range(K) for kw in range(K))
        row_start = (0,) * KK
        S = max(Lt + max(col_off), Hp * Wp)
        src = x_pad.reshape(N, C, Hp * Wp)
        if S > Hp * Wp:
            src = jnp.pad(src, ((0, 0), (0, 0), (0, S - Hp * Wp)))
        R = C
        crop = Ho * Wp
    else:
        # TODO(synk): stride>1 re-materializes per-tap decimated windows in the
        # wrapper (~KK/stride^2 x input bytes); in-kernel strided gather would
        # avoid it.  Correctness-preserving fallback path, unused by the test.
        Lt = _round_up(Ho * Wo, 128)
        hs = (Ho - 1) * stride + 1
        ws = (Wo - 1) * stride + 1
        taps = jnp.stack(
            [x_pad[:, :, kh:kh + hs:stride, kw:kw + ws:stride].reshape(N, C, Ho * Wo)
             for kh in range(K) for kw in range(K)], axis=1)          # (N,KK,C,L)
        src = taps.reshape(N, KK * C, Ho * Wo)
        if Lt > Ho * Wo:
            src = jnp.pad(src, ((0, 0), (0, 0), (0, Lt - Ho * Wo)))
        col_off = (0,) * KK
        row_start = tuple(t * C for t in range(KK))
        R = KK * C
        S = Lt
        crop = Ho * Wo

    # Weights as per-channel column vectors (no in-kernel relayout).
    dw_t = jnp.transpose(dw_w[:, 0].reshape(C, KK), (1, 0))[:, :, None]   # (KK,C,1)
    pw_t = jnp.transpose(pw_w[:, :, 0, 0], (1, 0))[:, :, None]            # (C,OC,1)

    has_bias = pw_b is not None
    use_mxu = (C >= 32) or (OC >= 32)        # review: MXU from ~32 channels, not 128

    # Cap the per-chunk live f32 set (~(2C+OC)*chunk*4 B) well under the vreg file.
    max_chunk = (128 * 1024) // (4 * max(2 * C + OC, 1))
    chunk = min(Lt, max(128, (max_chunk // 128) * 128))

    in_specs = [
        pl.BlockSpec((1, R, S), lambda n: (n, 0, 0)),
        pl.BlockSpec((KK, C, 1), lambda n: (0, 0, 0)),
        pl.BlockSpec((C, OC, 1), lambda n: (0, 0, 0)),
    ]
    operands = [src, dw_t, pw_t]
    if has_bias:
        in_specs.append(pl.BlockSpec((OC, 1), lambda n: (0, 0)))
        operands.append(pw_b.reshape(OC, 1))

    # Whole image per grid step; double-buffered in + out must fit VMEM.
    # TODO(synk): very large images need Ho-row tiling with a (K-1)-row halo.
    step_bytes = 2 * 4 * (R * S + OC * Lt)
    assert step_bytes < 24 * 1024 * 1024, "image too large for single-block DSC2d kernel"

    kern = functools.partial(
        _dsc2d_kernel, row_start=row_start, col_off=col_off, C=C, OC=OC,
        KK=KK, Lt=Lt, chunk=chunk, use_mxu=use_mxu, has_bias=has_bias)

    out_flat = pl.pallas_call(
        kern,
        out_shape=jax.ShapeDtypeStruct((N, OC, Lt), x.dtype),
        grid_spec=pltpu.PrefetchScalarGridSpec(
            num_scalar_prefetch=0,
            grid=(N,),
            in_specs=in_specs,
            out_specs=pl.BlockSpec((1, OC, Lt), lambda n: (n, 0, 0)),
        ),
        compiler_params=pltpu.CompilerParams(
            dimension_semantics=("parallel",),
            vmem_limit_bytes=_vmem_limit_bytes(),
        ),
    )(*operands)

    if stride == 1:
        # Padded-coordinate flat output -> drop the K-1 garbage cols per row.
        out = out_flat[:, :, :crop].reshape(N, OC, Ho, Wp)[:, :, :, :Wo]
    else:
        out = out_flat[:, :, :crop].reshape(N, OC, Ho, Wo)
    return out


def dsc2d_reference(x, dw_w, pw_w, pw_b=None, *, stride=1, padding=1):
    """Pure-JAX reference using lax conv (matches PyTorch NCHW conv semantics)."""
    C = x.shape[1]
    dw = jax.lax.conv_general_dilated(
        x, dw_w, window_strides=(stride, stride),
        padding=[(padding, padding), (padding, padding)],
        dimension_numbers=("NCHW", "OIHW", "NCHW"),
        feature_group_count=C)
    out = jax.lax.conv_general_dilated(
        dw, pw_w, window_strides=(1, 1), padding="VALID",
        dimension_numbers=("NCHW", "OIHW", "NCHW"))
    if pw_b is not None:
        out = out + pw_b[None, :, None, None]
    return out


if __name__ == "__main__":
    # DSC2d(in_ch=4, out_ch=8, kernel=3, stride=1, padding=1, bias=False)
    N, C, OC, H, W, K = 2, 4, 8, 16, 16, 3
    stride, padding = 1, 1

    key = jax.random.PRNGKey(0)
    kx, kd, kp, kb = jax.random.split(key, 4)
    x = jax.random.normal(kx, (N, C, H, W), jnp.float32)
    # Deterministic synthetic parameters (shapes as in the PyTorch __init__).
    dw_w = jax.random.normal(kd, (C, 1, K, K), jnp.float32) * (1.0 / math.sqrt(K * K))
    pw_w = jax.random.normal(kp, (OC, C, 1, 1), jnp.float32) * (1.0 / math.sqrt(C))
    pw_b = jax.random.normal(kb, (OC,), jnp.float32)

    # Module default: bias=False.
    out = dsc2d_pallas(x, dw_w, pw_w, None, stride=stride, padding=padding)
    out = jax.block_until_ready(out)
    ref = dsc2d_reference(x, dw_w, pw_w, None, stride=stride, padding=padding)
    np.testing.assert_allclose(np.asarray(out), np.asarray(ref), rtol=1e-5, atol=1e-5)

    # Also exercise the bias=True path (review correctness concern).
    out_b = dsc2d_pallas(x, dw_w, pw_w, pw_b, stride=stride, padding=padding)
    out_b = jax.block_until_ready(out_b)
    ref_b = dsc2d_reference(x, dw_w, pw_w, pw_b, stride=stride, padding=padding)
    np.testing.assert_allclose(np.asarray(out_b), np.asarray(ref_b), rtol=1e-5, atol=1e-5)

    print("KERNEL_OK")
</pallas_src>

<mosaic_0001>
module attributes {stable_mosaic.version = 11 : i64} {
  func.func @_dsc2d_kernel(%arg0: i32, %arg1: memref<1x4x422xf32, #tpu.memory_space<vmem>>, %arg2: memref<9x4x1xf32, #tpu.memory_space<vmem>>, %arg3: memref<4x8x1xf32, #tpu.memory_space<vmem>>, %arg4: memref<1x8x384xf32, #tpu.memory_space<vmem>>) attributes {dimension_semantics = [#tpu.dimension_semantics<parallel>], iteration_bounds = array<i64: 2>, scalar_prefetch = 0 : i64, scratch_operands = 0 : i64, tpu.core_type = #tpu.core_type<tc>, window_params = [{transform_indices = @transform_0, window_bounds = array<i64: 1, 4, 422>}, {pipeline_mode = #tpu.pipeline_mode<synchronous>, transform_indices = @transform_1, window_bounds = array<i64: 9, 4, 1>}, {pipeline_mode = #tpu.pipeline_mode<synchronous>, transform_indices = @transform_2, window_bounds = array<i64: 4, 8, 1>}, {transform_indices = @transform_3, window_bounds = array<i64: 1, 8, 384>}]} {
    %c0 = arith.constant 0 : index
    %c0_0 = arith.constant 0 : index
    %c0_1 = arith.constant 0 : index
    %0 = vector.load %arg2[%c0, %c0_0, %c0_1] : memref<9x4x1xf32, #tpu.memory_space<vmem>>, vector<9x4x1xf32>
    %c0_2 = arith.constant 0 : index
    %c0_3 = arith.constant 0 : index
    %c0_4 = arith.constant 0 : index
    %1 = vector.load %arg3[%c0_2, %c0_3, %c0_4] : memref<4x8x1xf32, #tpu.memory_space<vmem>>, vector<4x8x1xf32>
    %c0_5 = arith.constant 0 : index
    %c0_6 = arith.constant 0 : index
    %c0_7 = arith.constant 0 : index
    %2 = vector.load %arg1[%c0_5, %c0_6, %c0_7] : memref<1x4x422xf32, #tpu.memory_space<vmem>>, vector<1x4x384xf32>
    %3 = vector.shape_cast %2 : vector<1x4x384xf32> to vector<4x384xf32>
    %4 = vector.extract_strided_slice %0 {offsets = [0, 0, 0], sizes = [1, 4, 1], strides = [1, 1, 1]} : vector<9x4x1xf32> to vector<1x4x1xf32>
    %5 = vector.shape_cast %4 : vector<1x4x1xf32> to vector<4x1xf32>
    %6 = vector.broadcast %5 : vector<4x1xf32> to vector<4x384xf32>
    %7 = arith.mulf %3, %6 : vector<4x384xf32>
    %c0_8 = arith.constant 0 : index
    %c0_9 = arith.constant 0 : index
    %c1 = arith.constant 1 : index
    %8 = vector.load %arg1[%c0_8, %c0_9, %c1] : memref<1x4x422xf32, #tpu.memory_space<vmem>>, vector<1x4x384xf32>
    %9 = vector.shape_cast %8 : vector<1x4x384xf32> to vector<4x384xf32>
    %10 = vector.extract_strided_slice %0 {offsets = [1, 0, 0], sizes = [1, 4, 1], strides = [1, 1, 1]} : vector<9x4x1xf32> to vector<1x4x1xf32>
    %11 = vector.shape_cast %10 : vector<1x4x1xf32> to vector<4x1xf32>
    %12 = vector.broadcast %11 : vector<4x1xf32> to vector<4x384xf32>
    %13 = arith.mulf %9, %12 : vector<4x384xf32>
    %c0_10 = arith.constant 0 : index
    %c0_11 = arith.constant 0 : index
    %c2 = arith.constant 2 : index
    %14 = vector.load %arg1[%c0_10, %c0_11, %c2] : memref<1x4x422xf32, #tpu.memory_space<vmem>>, vector<1x4x384xf32>
    %15 = vector.shape_cast %14 : vector<1x4x384xf32> to vector<4x384xf32>
    %16 = vector.extract_strided_slice %0 {offsets = [2, 0, 0], sizes = [1, 4, 1], strides = [1, 1, 1]} : vector<9x4x1xf32> to vector<1x4x1xf32>
    %17 = vector.shape_cast %16 : vector<1x4x1xf32> to vector<4x1xf32>
    %18 = vector.broadcast %17 : vector<4x1xf32> to vector<4x384xf32>
    %19 = arith.mulf %15, %18 : vector<4x384xf32>
    %20 = arith.addf %7, %19 : vector<4x384xf32>
    %c0_12 = arith.constant 0 : index
    %c0_13 = arith.constant 0 : index
    %c18 = arith.constant 18 : index
    %21 = vector.load %arg1[%c0_12, %c0_13, %c18] : memref<1x4x422xf32, #tpu.memory_space<vmem>>, vector<1x4x384xf32>
    %22 = vector.shape_cast %21 : vector<1x4x384xf32> to vector<4x384xf32>
    %23 = vector.extract_strided_slice %0 {offsets = [3, 0, 0], sizes = [1, 4, 1], strides = [1, 1, 1]} : vector<9x4x1xf32> to vector<1x4x1xf32>
    %24 = vector.shape_cast %23 : vector<1x4x1xf32> to vector<4x1xf32>
    %25 = vector.broadcast %24 : vector<4x1xf32> to vector<4x384xf32>
    %26 = arith.mulf %22, %25 : vector<4x384xf32>
    %27 = arith.addf %13, %26 : vector<4x384xf32>
    %c0_14 = arith.constant 0 : index
    %c0_15 = arith.constant 0 : index
    %c19 = arith.constant 19 : index
    %28 = vector.load %arg1[%c0_14, %c0_15, %c19] : memref<1x4x422xf32, #tpu.memory_space<vmem>>, vector<1x4x384xf32>
    %29 = vector.shape_cast %28 : vector<1x4x384xf32> to vector<4x384xf32>
    %30 = vector.extract_strided_slice %0 {offsets = [4, 0, 0], sizes = [1, 4, 1], strides = [1, 1, 1]} : vector<9x4x1xf32> to vector<1x4x1xf32>
    %31 = vector.shape_cast %30 : vector<1x4x1xf32> to vector<4x1xf32>
    %32 = vector.broadcast %31 : vector<4x1xf32> to vector<4x384xf32>
    %33 = arith.mulf %29, %32 : vector<4x384xf32>
    %34 = arith.addf %20, %33 : vector<4x384xf32>
    %c0_16 = arith.constant 0 : index
    %c0_17 = arith.constant 0 : index
    %c20 = arith.constant 20 : index
    %35 = vector.load %arg1[%c0_16, %c0_17, %c20] : memref<1x4x422xf32, #tpu.memory_space<vmem>>, vector<1x4x384xf32>
    %36 = vector.shape_cast %35 : vector<1x4x384xf32> to vector<4x384xf32>
    %37 = vector.extract_strided_slice %0 {offsets = [5, 0, 0], sizes = [1, 4, 1], strides = [1, 1, 1]} : vector<9x4x1xf32> to vector<1x4x1xf32>
    %38 = vector.shape_cast %37 : vector<1x4x1xf32> to vector<4x1xf32>
    %39 = vector.broadcast %38 : vector<4x1xf32> to vector<4x384xf32>
    %40 = arith.mulf %36, %39 : vector<4x384xf32>
    %41 = arith.addf %27, %40 : vector<4x384xf32>
    %c0_18 = arith.constant 0 : index
    %c0_19 = arith.constant 0 : index
    %c36 = arith.constant 36 : index
    %42 = vector.load %arg1[%c0_18, %c0_19, %c36] : memref<1x4x422xf32, #tpu.memory_space<vmem>>, vector<1x4x384xf32>
    %43 = vector.shape_cast %42 : vector<1x4x384xf32> to vector<4x384xf32>
    %44 = vector.extract_strided_slice %0 {offsets = [6, 0, 0], sizes = [1, 4, 1], strides = [1, 1, 1]} : vector<9x4x1xf32> to vector<1x4x1xf32>
    %45 = vector.shape_cast %44 : vector<1x4x1xf32> to vector<4x1xf32>
    %46 = vector.broadcast %45 : vector<4x1xf32> to vector<4x384xf32>
    %47 = arith.mulf %43, %46 : vector<4x384xf32>
    %48 = arith.addf %34, %47 : vector<4x384xf32>
    %c0_20 = arith.constant 0 : index
    %c0_21 = arith.constant 0 : index
    %c37 = arith.constant 37 : index
    %49 = vector.load %arg1[%c0_20, %c0_21, %c37] : memref<1x4x422xf32, #tpu.memory_space<vmem>>, vector<1x4x384xf32>
    %50 = vector.shape_cast %49 : vector<1x4x384xf32> to vector<4x384xf32>
    %51 = vector.extract_strided_slice %0 {offsets = [7, 0, 0], sizes = [1, 4, 1], strides = [1, 1, 1]} : vector<9x4x1xf32> to vector<1x4x1xf32>
    %52 = vector.shape_cast %51 : vector<1x4x1xf32> to vector<4x1xf32>
    %53 = vector.broadcast %52 : vector<4x1xf32> to vector<4x384xf32>
    %54 = arith.mulf %50, %53 : vector<4x384xf32>
    %55 = arith.addf %41, %54 : vector<4x384xf32>
    %c0_22 = arith.constant 0 : index
    %c0_23 = arith.constant 0 : index
    %c38 = arith.constant 38 : index
    %56 = vector.load %arg1[%c0_22, %c0_23, %c38] : memref<1x4x422xf32, #tpu.memory_space<vmem>>, vector<1x4x384xf32>
    %57 = vector.shape_cast %56 : vector<1x4x384xf32> to vector<4x384xf32>
    %58 = vector.extract_strided_slice %0 {offsets = [8, 0, 0], sizes = [1, 4, 1], strides = [1, 1, 1]} : vector<9x4x1xf32> to vector<1x4x1xf32>
    %59 = vector.shape_cast %58 : vector<1x4x1xf32> to vector<4x1xf32>
    %60 = vector.broadcast %59 : vector<4x1xf32> to vector<4x384xf32>
    %61 = arith.mulf %57, %60 : vector<4x384xf32>
    %62 = arith.addf %48, %61 : vector<4x384xf32>
    %63 = arith.addf %62, %55 : vector<4x384xf32>
    %64 = vector.extract_strided_slice %1 {offsets = [0, 0, 0], sizes = [1, 8, 1], strides = [1, 1, 1]} : vector<4x8x1xf32> to vector<1x8x1xf32>
    %65 = vector.shape_cast %64 : vector<1x8x1xf32> to vector<8x1xf32>
    %66 = vector.extract_strided_slice %63 {offsets = [0, 0], sizes = [1, 384], strides = [1, 1]} : vector<4x384xf32> to vector<1x384xf32>
    %67 = vector.broadcast %65 : vector<8x1xf32> to vector<8x384xf32>
    %68 = vector.broadcast %66 : vector<1x384xf32> to vector<8x384xf32>
    %69 = arith.mulf %67, %68 : vector<8x384xf32>
    %70 = vector.extract_strided_slice %1 {offsets = [1, 0, 0], sizes = [1, 8, 1], strides = [1, 1, 1]} : vector<4x8x1xf32> to vector<1x8x1xf32>
    %71 = vector.shape_cast %70 : vector<1x8x1xf32> to vector<8x1xf32>
    %72 = vector.extract_strided_slice %63 {offsets = [1, 0], sizes = [1, 384], strides = [1, 1]} : vector<4x384xf32> to vector<1x384xf32>
    %73 = vector.broadcast %71 : vector<8x1xf32> to vector<8x384xf32>
    %74 = vector.broadcast %72 : vector<1x384xf32> to vector<8x384xf32>
    %75 = arith.mulf %73, %74 : vector<8x384xf32>
    %76 = vector.extract_strided_slice %1 {offsets = [2, 0, 0], sizes = [1, 8, 1], strides = [1, 1, 1]} : vector<4x8x1xf32> to vector<1x8x1xf32>
    %77 = vector.shape_cast %76 : vector<1x8x1xf32> to vector<8x1xf32>
    %78 = vector.extract_strided_slice %63 {offsets = [2, 0], sizes = [1, 384], strides = [1, 1]} : vector<4x384xf32> to vector<1x384xf32>
    %79 = vector.broadcast %77 : vector<8x1xf32> to vector<8x384xf32>
    %80 = vector.broadcast %78 : vector<1x384xf32> to vector<8x384xf32>
    %81 = arith.mulf %79, %80 : vector<8x384xf32>
    %82 = arith.addf %69, %81 : vector<8x384xf32>
    %83 = vector.extract_strided_slice %1 {offsets = [3, 0, 0], sizes = [1, 8, 1], strides = [1, 1, 1]} : vector<4x8x1xf32> to vector<1x8x1xf32>
    %84 = vector.shape_cast %83 : vector<1x8x1xf32> to vector<8x1xf32>
    %85 = vector.extract_strided_slice %63 {offsets = [3, 0], sizes = [1, 384], strides = [1, 1]} : vector<4x384xf32> to vector<1x384xf32>
    %86 = vector.broadcast %84 : vector<8x1xf32> to vector<8x384xf32>
    %87 = vector.broadcast %85 : vector<1x384xf32> to vector<8x384xf32>
    %88 = arith.mulf %86, %87 : vector<8x384xf32>
    %89 = arith.addf %75, %88 : vector<8x384xf32>
    %90 = arith.addf %82, %89 : vector<8x384xf32>
    %c0_24 = arith.constant 0 : index
    %c0_25 = arith.constant 0 : index
    %c0_26 = arith.constant 0 : index
    %91 = vector.load %arg4[%c0_24, %c0_25, %c0_26] : memref<1x8x384xf32, #tpu.memory_space<vmem>>, vector<1x8x384xf32>
    %92 = vector.shape_cast %91 : vector<1x8x384xf32> to vector<8x384xf32>
    %93 = vector.shape_cast %90 : vector<8x384xf32> to vector<1x8x384xf32>
    tpu.vector_store %arg4[%c0_24, %c0_25, %c0_26], %93 {strides = array<i32>} : memref<1x8x384xf32, #tpu.memory_space<vmem>>, vector<1x8x384xf32>,
    return
  }
  func.func @transform_0(%arg0: i32) -> (i32, i32, i32) {
    %c0_i32 = arith.constant 0 : i32
    %c0_i32_0 = arith.constant 0 : i32
    %c0_i32_1 = arith.constant 0 : i32
    return %arg0, %c0_i32, %c0_i32_0 : i32, i32, i32
  }
  func.func @transform_1(%arg0: i32) -> (i32, i32, i32) {
    %c0_i32 = arith.constant 0 : i32
    %c0_i32_0 = arith.constant 0 : i32
    %c0_i32_1 = arith.constant 0 : i32
    %c0_i32_2 = arith.constant 0 : i32
    return %c0_i32, %c0_i32_0, %c0_i32_1 : i32, i32, i32
  }
  func.func @transform_2(%arg0: i32) -> (i32, i32, i32) {
    %c0_i32 = arith.constant 0 : i32
    %c0_i32_0 = arith.constant 0 : i32
    %c0_i32_1 = arith.constant 0 : i32
    %c0_i32_2 = arith.constant 0 : i32
    return %c0_i32, %c0_i32_0, %c0_i32_1 : i32, i32, i32
  }
  func.func @transform_3(%arg0: i32) -> (i32, i32, i32) {
    %c0_i32 = arith.constant 0 : i32
    %c0_i32_0 = arith.constant 0 : i32
    %c0_i32_1 = arith.constant 0 : i32
    return %arg0, %c0_i32, %c0_i32_0 : i32, i32, i32
  }
}

</mosaic_0001>

<llo_original>
// kernel: tpu_custom_call.1
$region0: #{tpu_custom_call.1}
  #allocation0 [shape = 'u32[]', space=smem, size = 0x4, offset = 0x4, fixed_abs, tag = 'smem constant byte address 0x4 - core index']
  #allocation1 [shape = 'u32[144,128]{1,0:T(1,128)}', space=vmem, size = 0x12000, scoped, tag = 'internal scratch']
  %s0 = inlined_call_operand.vmem [shape: f32[2,4,422], index: 0, kind: input, shape index: {}]
  %s1 = inlined_call_operand.vmem [shape: f32[9,4,1], index: 1, kind: input, shape index: {}]
  %s2 = inlined_call_operand.vmem [shape: f32[4,8,1], index: 2, kind: input, shape index: {}]
  %s3 = inlined_call_operand.hbm [shape: f32[2,8,384], index: 3, kind: output, shape index: {}]
  %s4 = sld [smem:[#allocation0]]
  $region45: #{tpu_custom_call.1} parent=0
    _
  %s6 = ssub.s32 1, %s4
  %s7 = scalar_select 0, %s6, %s4
  $region1: #{tpu_custom_call.1} parent=0
    #allocation2 [shape = 'u8[24576]{0}', space=vmem, size = 0x6000, scoped, tag = 'output window, operand 0']
    #allocation3 [shape = 's32[2]{0}', space=sflag, size = 0x8, scoped, tag = 'scoped memory for tpu_custom_call.1']
    %8 = vsyncpa [#allocation3], 0
    %s9 = scalar_lea.sflag [#allocation3], 1
    %10 = vsyncpa %s9, 0
    loop: start=0, step=1, limit=4
    $region2: #{tpu_custom_call.1} parent=1 // loop_pre_header
      _
    $region3: #{tpu_custom_call.1} parent=1 // loop_header
      %s12 = sphi 0, %s16
      %p13 = scmp.ge.s32.totalorder %s12, 4
      %s22 = sphi 0, %s24
      %s25 = sphi 0, %s22
      %s26 = sphi 0, %s25
      %s42 = sphi 0, %s26
      %s46 = sphi 0, %s46
      %s48 = sphi 0, %s46
      %s49 = sphi 0, %s48
      %s63 = sphi 0, %s49
      %s67 = sphi 0, %s67
      %s69 = sphi 0, %s67
      %s70 = sphi 0, %s69
      %s84 = sphi 0, %s70
      %s90 = sphi 0, %s92
      %s93 = sphi 0, %s90
      %s94 = sphi 0, %s93
      %s110 = sphi 0, %s94
    $region4: #{tpu_custom_call.1} parent=1 // loop_header_branch
      %15 = sbr.rel (%p13) target = $region8
    $region5: #{tpu_custom_call.1} parent=1 // loop_body
      %s17 = ssub.s32 %s12, 1
      %s18 = ssub.s32 %s12, 2
      %s19 = sadd.s32 %s12, 1
      %s20 = ssub.s32 %s12, %s19
      %p21 = scmp.eq.s32.totalorder %s20, 0
      %s23 = sadd.s32 %s22, 1
      %s24 = scalar_select %p21, %s22, %s23
      %p27 = pneg %p21
      %p28 = scmp.eq.s32.totalorder %s12, 1
      %p29 = por %p27, %p28
      %p30 = scmp.ne.s32.totalorder %s22, %s25
      %p31 = scmp.eq.s32.totalorder %s12, 0
      %p32 = por %p30, %p31
      %p33 = scmp.ne.s32.totalorder %s22, %s25
      %p34 = scmp.eq.s32.totalorder %s17, 1
      %p35 = por %p33, %p34
      %p36 = scmp.ne.s32.totalorder %s25, %s26
      %p37 = scmp.eq.s32.totalorder %s17, 0
      %p38 = por %p36, %p37
      %p39 = scmp.ne.s32.totalorder %s25, %s26
      %p40 = scmp.eq.s32.totalorder %s18, 1
      %p41 = por %p39, %p40
      %p43 = scmp.ne.s32.totalorder %s26, %s42
      %p44 = scmp.eq.s32.totalorder %s18, 0
      %p45 = por %p43, %p44
      %s47 = sadd.s32 %s46, 1
      %p50 = scmp.eq.s32.totalorder %s12, 1
      %p51 = scmp.ne.s32.totalorder %s46, %s48
      %p52 = scmp.eq.s32.totalorder %s12, 0
      %p53 = por %p51, %p52
      %p54 = scmp.ne.s32.totalorder %s46, %s48
      %p55 = scmp.eq.s32.totalorder %s17, 1
      %p56 = por %p54, %p55
      %p57 = scmp.ne.s32.totalorder %s48, %s49
      %p58 = scmp.eq.s32.totalorder %s17, 0
      %p59 = por %p57, %p58
      %p60 = scmp.ne.s32.totalorder %s48, %s49
      %p61 = scmp.eq.s32.totalorder %s18, 1
      %p62 = por %p60, %p61
      %p64 = scmp.ne.s32.totalorder %s49, %s63
      %p65 = scmp.eq.s32.totalorder %s18, 0
      %p66 = por %p64, %p65
      %s68 = sadd.s32 %s67, 1
      %p71 = scmp.eq.s32.totalorder %s12, 1
      %p72 = scmp.ne.s32.totalorder %s67, %s69
      %p73 = scmp.eq.s32.totalorder %s12, 0
      %p74 = por %p72, %p73
      %p75 = scmp.ne.s32.totalorder %s67, %s69
      %p76 = scmp.eq.s32.totalorder %s17, 1
      %p77 = por %p75, %p76
      %p78 = scmp.ne.s32.totalorder %s69, %s70
      %p79 = scmp.eq.s32.totalorder %s17, 0
      %p80 = por %p78, %p79
      %p81 = scmp.ne.s32.totalorder %s69, %s70
      %p82 = scmp.eq.s32.totalorder %s18, 1
      %p83 = por %p81, %p82
      %p85 = scmp.ne.s32.totalorder %s70, %s84
      %p86 = scmp.eq.s32.totalorder %s18, 0
      %p87 = por %p85, %p86
      %s88 = ssub.s32 %s12, %s19
      %p89 = scmp.eq.s32.totalorder %s88, 0
      %s91 = sadd.s32 %s90, 1
      %s92 = scalar_select %p89, %s90, %s91
      %p95 = pneg %p89
      %p96 = scmp.eq.s32.totalorder %s12, 1
      %p97 = por %p95, %p96
      %p98 = scmp.ne.s32.totalorder %s90, %s93
      %p99 = scmp.eq.s32.totalorder %s12, 0
      %p100 = por %p98, %p99
      %p101 = scmp.ne.s32.totalorder %s90, %s93
      %p102 = scmp.eq.s32.totalorder %s17, 1
      %p103 = por %p101, %p102
      %p104 = scmp.ne.s32.totalorder %s93, %s94
      %p105 = scmp.eq.s32.totalorder %s17, 0
      %p106 = por %p104, %p105
      %p107 = scmp.ne.s32.totalorder %s93, %s94
      %p108 = scmp.eq.s32.totalorder %s18, 1
      %p109 = por %p107, %p108
      %p111 = scmp.ne.s32.totalorder %s94, %s110
      %p112 = scmp.eq.s32.totalorder %s18, 0
      %p113 = por %p111, %p112
      %p114 = scmp.le.s32.totalorder 1, %s12
      %p115 = scmp.lt.s32.totalorder %s12, 3
      %p116 = pnand %p114, %p115
      %p117 = pneg %p116
      // Predicated region
      $region9: #{tpu_custom_call.1} parent=5 // pred_check
        _
      $region10: #{tpu_custom_call.1} parent=5 // pred_check_branch
        %119 = sbr.rel (%p116) target = $region12
      $region11: #{tpu_custom_call.1} parent=5 // pred_region
        %s120 = ssub.s32 %s12, 1
        // Predicated region
        $region13: #{tpu_custom_call.1} parent=11 // pred_check
          %p121 = pneg %p59
        $region14: #{tpu_custom_call.1} parent=11 // pred_check_branch
          %123 = sbr.rel (%p121) target = $region16
        $region15: #{tpu_custom_call.1} parent=11 // pred_region
          _
        $region16: #{tpu_custom_call.1} parent=11 // pred_fallthru
          _
        // Predicated region
        $region17: #{tpu_custom_call.1} parent=11 // pred_check
          %p124 = pneg %p80
        $region18: #{tpu_custom_call.1} parent=11 // pred_check_branch
          %126 = sbr.rel (%p124) target = $region20
        $region19: #{tpu_custom_call.1} parent=11 // pred_region
          _
        $region20: #{tpu_custom_call.1} parent=11 // pred_fallthru
          _
      $region12: #{tpu_custom_call.1} parent=5 // pred_fallthru
        _
      %p127 = scmp.lt.s32.totalorder %s12, 2
      // Predicated region
      $region21: #{tpu_custom_call.1} parent=5 // pred_check
        %p128 = pneg %p127
      $region22: #{tpu_custom_call.1} parent=5 // pred_check_branch
        %130 = sbr.rel (%p128) target = $region24
      $region23: #{tpu_custom_call.1} parent=5 // pred_region
        // Predicated region
        $region25: #{tpu_custom_call.1} parent=23 // pred_check
          %p131 = pneg %p32
        $region26: #{tpu_custom_call.1} parent=23 // pred_check_branch
          %133 = sbr.rel (%p131) target = $region28
        $region27: #{tpu_custom_call.1} parent=23 // pred_region
          %p134 = scmp.lt.s32.totalorder %s12, 1
          %s135 = scalar_select %p134, %s12, 1
          %s136 = smul.addr %s135, 4
          %s137 = smul.addr %s136, 4
          %s138 = scalar_lea.vmem %s0, %s137
        $region28: #{tpu_custom_call.1} parent=23 // pred_fallthru
          _
      $region24: #{tpu_custom_call.1} parent=5 // pred_fallthru
        _
      %p139 = scmp.le.s32.totalorder 1, %s12
      %p140 = scmp.lt.s32.totalorder %s12, 3
      %p141 = pnand %p139, %p140
      %p142 = pneg %p141
      // Predicated region
      $region29: #{tpu_custom_call.1} parent=5 // pred_check
        _
      $region30: #{tpu_custom_call.1} parent=5 // pred_check_branch
        %144 = sbr.rel (%p141) target = $region32
      $region31: #{tpu_custom_call.1} parent=5 // pred_region
        %s145 = ssub.s32 %s12, 1
        %p146 = scmp.lt.s32.totalorder %s17, 1
        %s147 = scalar_select %p146, %s17, 1
        %s148 = smul.addr %s147, 4
        %s149 = smul.addr %s148, 4
        %s150 = scalar_lea.vmem %s0, %s149
        %p151 = pneg %p38
        %p152 = pneg %p35
        %p153 = pneg %p59
        %p154 = pneg %p56
        %p155 = pneg %p80
        %p156 = pneg %p77
        %p157 = pneg %p106
        %p158 = pneg %p103
        %s159 = sand.u32 %s93, 1
        %s160 = scalar_lea.sflag [#allocation3], %s159
        %s161 = sand.u32 %s93, 1
        %s162 = smul.addr %s161, 24
        %s163 = scalar_lea.vmem [#allocation2], %s162
        %p164 = scmp.lt.s32.totalorder %s17, 1
        %s165 = scalar_select %p164, %s17, 1
        %s166 = smul.addr %s165, 4
        %s167 = smul.addr %s166, 4
        %s168 = scalar_lea.vmem %s0, %s167
        %v169 = vld [vmem:[%s1] sm:$0xf]
        %v170 = vld [vmem:[%s1 + $0x4] sm:$0xf]
        %v171 = vld [vmem:[%s1 + $0x8] sm:$0xf]
        %v172 = vld [vmem:[%s1 + $0xc] sm:$0xf]
        %v173 = vld [vmem:[%s1 + $0x10] sm:$0xf]
        %v174 = vld [vmem:[%s1 + $0x14] sm:$0xf]
        %v175 = vld [vmem:[%s1 + $0x18] sm:$0xf]
        %v176 = vld [vmem:[%s1 + $0x1c] sm:$0xf]
        %v177 = vld [vmem:[%s1 + $0x20] sm:$0xf]
        %v178 = vld [vmem:[%s2] sm:$0xff]
        %v179 = vld [vmem:[%s2 + $0x8] sm:$0xff]
        %v180 = vld [vmem:[%s2 + $0x10] sm:$0xff]
        %v181 = vld [vmem:[%s2 + $0x18] sm:$0xff]
        %v182 = vld [vmem:[%s168] sm:$0xff]
        %v183 = vld [vmem:[%s168 + $0x8] sm:$0xf]
        %185 = vset.pattern.permute.xlu0 0
        %186 = vperm.xlu0 %185, %v169
        %v187 = vpop.permute.xlu0 %186
        %v189 = vunpack.c.l.s4 839922192
        %v190 = vunpack.c.0.s8 %v189
        %v191 = vlaneseq
        %v192 = vshrl.u32 %v191, 7
        %v193 = vsub.s32 %v190, %v192
        %v194 = vrot.slane %v187, %v193
        %v196 = vmul.f32 %v182, %v194
        %v197 = vmul.f32 %v183, %v194
        %v198 = vld [vmem:[%s168] sm:$0xff]
        %v199 = vld [vmem:[%s168 + $0x8] sm:$0xff]
        %201 = vset.pattern.permute.xlu0 0
        %202 = vperm.xlu0 %201, %v170
        %v203 = vpop.permute.xlu0 %202
        %v205 = vunpack.c.l.s4 839922192
        %v206 = vunpack.c.0.s8 %v205
        %v207 = vlaneseq
        %v208 = vshrl.u32 %v207, 7
        %v209 = vsub.s32 %v206, %v208
        %v210 = vrot.slane %v203, %v209
        %v212 = vmul.f32 %v198, %v210
        %v213 = vmul.f32 %v199, %v210
        %215 = vset.pattern.permute.xlu0 0
        %216 = vperm.xlu0 %215, %v171
        %v217 = vpop.permute.xlu0 %216
        %v219 = vunpack.c.l.s4 839922192
        %v220 = vunpack.c.0.s8 %v219
        %v221 = vlaneseq
        %v222 = vshrl.u32 %v221, 7
        %v223 = vsub.s32 %v220, %v222
        %v224 = vrot.slane %v217, %v223
        %v226 = vmul.f32 %v198, %v224
        %v227 = vmul.f32 %v199, %v224
        %230 = vrot.lane.b32.xlu0 %v226, 126
        %v231 = vpop.permute.xlu0 %230
        %232 = vrot.lane.b32.xlu0 %v227, 126
        %v233 = vpop.permute.xlu0 %232
        %v234 = vrot.slane %v231, 4
        %v235 = vrot.slane %v233, 4
        %vm236 = vcmask 1043456
        %v237 = vsel %vm236, %v234, %v235
        %vm238 = vcmask 1031168
        %v239 = vsel %vm238, %v231, %v237
        %v240 = vsel %vm238, %v233, %v235
        %v243 = vadd.f32 %v196, %v239
        %v244 = vadd.f32 %v197, %v240
        %246 = vset.pattern.permute.xlu0 0
        %247 = vperm.xlu0 %246, %v172
        %v248 = vpop.permute.xlu0 %247
        %v250 = vunpack.c.l.s4 839922192
        %v251 = vunpack.c.0.s8 %v250
        %v252 = vlaneseq
        %v253 = vshrl.u32 %v252, 7
        %v254 = vsub.s32 %v251, %v253
        %v255 = vrot.slane %v248, %v254
        %v257 = vmul.f32 %v198, %v255
        %v258 = vmul.f32 %v199, %v255
        %261 = vrot.lane.b32.xlu0 %v257, 111
        %v262 = vpop.permute.xlu0 %261
        %263 = vrot.lane.b32.xlu0 %v258, 111
        %v264 = vpop.permute.xlu0 %263
        %v265 = vrot.slane %v262, 4
        %v266 = vrot.slane %v264, 4
        %v267 = vsel %vm236, %v265, %v266
        %vm268 = vcmask 908288
        %v269 = vsel %vm268, %v262, %v267
        %v270 = vsel %vm268, %v264, %v266
        %v273 = vadd.f32 %v212, %v269
        %v274 = vadd.f32 %v213, %v270
        %276 = vset.pattern.permute.xlu0 0
        %277 = vperm.xlu0 %276, %v173
        %v278 = vpop.permute.xlu0 %277
        %v280 = vunpack.c.l.s4 839922192
        %v281 = vunpack.c.0.s8 %v280
        %v282 = vlaneseq
        %v283 = vshrl.u32 %v282, 7
        %v284 = vsub.s32 %v281, %v283
        %v285 = vrot.slane %v278, %v284
        %v287 = vmul.f32 %v198, %v285
        %v288 = vmul.f32 %v199, %v285
        %291 = vrot.lane.b32.xlu0 %v287, 109
        %v292 = vpop.permute.xlu0 %291
        %293 = vrot.lane.b32.xlu0 %v288, 109
        %v294 = vpop.permute.xlu0 %293
        %v295 = vrot.slane %v292, 4
        %v296 = vrot.slane %v294, 4
        %v297 = vsel %vm236, %v295, %v296
        %vm298 = vcmask 891904
        %v299 = vsel %vm298, %v292, %v297
        %v300 = vsel %vm298, %v294, %v296
        %v303 = vadd.f32 %v243, %v299
        %v304 = vadd.f32 %v244, %v300
        %306 = vset.pattern.permute.xlu0 0
        %307 = vperm.xlu0 %306, %v174
        %v308 = vpop.permute.xlu0 %307
        %v310 = vunpack.c.l.s4 839922192
        %v311 = vunpack.c.0.s8 %v310
        %v312 = vlaneseq
        %v313 = vshrl.u32 %v312, 7
        %v314 = vsub.s32 %v311, %v313
        %v315 = vrot.slane %v308, %v314
        %v317 = vmul.f32 %v198, %v315
        %v318 = vmul.f32 %v199, %v315
        %321 = vrot.lane.b32.xlu0 %v317, 109
        %v322 = vpop.permute.xlu0 %321
        %323 = vrot.lane.b32.xlu0 %v318, 109
        %v324 = vpop.permute.xlu0 %323
        %v325 = vrot.slane %v322, 4
        %v326 = vrot.slane %v324, 4
        %v327 = vsel %vm236, %v325, %v326
        %v328 = vsel %vm298, %v322, %v327
        %v329 = vsel %vm298, %v324, %v326
        %v332 = vadd.f32 %v273, %v328
        %v333 = vadd.f32 %v274, %v329
        %335 = vset.pattern.permute.xlu0 0
        %336 = vperm.xlu0 %335, %v175
        %v337 = vpop.permute.xlu0 %336
        %v339 = vunpack.c.l.s4 839922192
        %v340 = vunpack.c.0.s8 %v339
        %v341 = vlaneseq
        %v342 = vshrl.u32 %v341, 7
        %v343 = vsub.s32 %v340, %v342
        %v344 = vrot.slane %v337, %v343
        %v346 = vmul.f32 %v198, %v344
        %v347 = vmul.f32 %v199, %v344
        %350 = vrot.lane.b32.xlu0 %v346, 92
        %v351 = vpop.permute.xlu0 %350
        %352 = vrot.lane.b32.xlu0 %v347, 92
        %v353 = vpop.permute.xlu0 %352
        %v354 = vrot.slane %v351, 4
        %v355 = vrot.slane %v353, 4
        %v356 = vsel %vm236, %v354, %v355
        %vm357 = vcmask 752640
        %v358 = vsel %vm357, %v351, %v356
        %v359 = vsel %vm357, %v353, %v355
        %v362 = vadd.f32 %v303, %v358
        %v363 = vadd.f32 %v304, %v359
        %365 = vset.pattern.permute.xlu0 0
        %366 = vperm.xlu0 %365, %v176
        %v367 = vpop.permute.xlu0 %366
        %v369 = vunpack.c.l.s4 839922192
        %v370 = vunpack.c.0.s8 %v369
        %v371 = vlaneseq
        %v372 = vshrl.u32 %v371, 7
        %v373 = vsub.s32 %v370, %v372
        %v374 = vrot.slane %v367, %v373
        %v376 = vmul.f32 %v198, %v374
        %v377 = vmul.f32 %v199, %v374
        %380 = vrot.lane.b32.xlu0 %v376, 92
        %v381 = vpop.permute.xlu0 %380
        %382 = vrot.lane.b32.xlu0 %v377, 92
        %v383 = vpop.permute.xlu0 %382
        %v384 = vrot.slane %v381, 4
        %v385 = vrot.slane %v383, 4
        %v386 = vsel %vm236, %v384, %v385
        %v387 = vsel %vm357, %v381, %v386
        %v388 = vsel %vm357, %v383, %v385
        %v391 = vadd.f32 %v332, %v387
        %v392 = vadd.f32 %v333, %v388
        %394 = vset.pattern.permute.xlu0 0
        %395 = vperm.xlu0 %394, %v177
        %v396 = vpop.permute.xlu0 %395
        %v398 = vunpack.c.l.s4 839922192
        %v399 = vunpack.c.0.s8 %v398
        %v400 = vlaneseq
        %v401 = vshrl.u32 %v400, 7
        %v402 = vsub.s32 %v399, %v401
        %v403 = vrot.slane %v396, %v402
        %v405 = vmul.f32 %v198, %v403
        %v406 = vmul.f32 %v199, %v403
        %409 = vrot.lane.b32.xlu0 %v405, 90
        %v410 = vpop.permute.xlu0 %409
        %411 = vrot.lane.b32.xlu0 %v406, 90
        %v412 = vpop.permute.xlu0 %411
        %v413 = vrot.slane %v410, 4
        %v414 = vrot.slane %v412, 4
        %v415 = vsel %vm236, %v413, %v414
        %vm416 = vcmask 736256
        %v417 = vsel %vm416, %v410, %v415
        %v418 = vsel %vm416, %v412, %v414
        %v421 = vadd.f32 %v362, %v417
        %v422 = vadd.f32 %v363, %v418
        %425 = vrot.lane.b32.xlu0 %v391, 127
        %v426 = vpop.permute.xlu0 %425
        %427 = vrot.lane.b32.xlu0 %v392, 127
        %v428 = vpop.permute.xlu0 %427
        %v429 = vrot.slane %v426, 4
        %v430 = vrot.slane %v428, 4
        %v431 = vsel %vm236, %v429, %v430
        %vm432 = vcmask 1039360
        %v433 = vsel %vm432, %v426, %v431
        %v434 = vsel %vm432, %v428, %v430
        %v437 = vadd.f32 %v421, %v433
        %v438 = vadd.f32 %v422, %v434
        %440 = vset.pattern.permute.xlu0 0
        %441 = vperm.xlu0 %440, %v178
        %v442 = vpop.permute.xlu0 %441
        %v446 = vlaneseq
        %v447 = vshrl.u32 %v446, 7
        %v448 = vsub.s32 0, %v447
        %v449 = vrot.slane %v437, %v448
        %v450 = vlaneseq
        %v451 = vshrl.u32 %v450, 7
        %v452 = vsub.s32 4, %v451
        %v453 = vrot.slane %v437, %v452
        %v454 = vlaneseq
        %v455 = vshrl.u32 %v454, 7
        %v456 = vsub.s32 0, %v455
        %v457 = vrot.slane %v438, %v456
        %v461 = vlaneseq
        %v462 = vshrl.u32 %v461, 7
        %v463 = vsub.s32 0, %v462
        %v464 = vrot.slane %v449, %v463
        %v465 = vlaneseq
        %v466 = vshrl.u32 %v465, 7
        %v467 = vsub.s32 0, %v466
        %v468 = vrot.slane %v453, %v467
        %v469 = vlaneseq
        %v470 = vshrl.u32 %v469, 7
        %v471 = vsub.s32 0, %v470
        %v472 = vrot.slane %v457, %v471
        %v473 = vmul.f32 %v442, %v464
        %v474 = vmul.f32 %v442, %v468
        %v475 = vmul.f32 %v442, %v472
        %477 = vset.pattern.permute.xlu0 0
        %478 = vperm.xlu0 %477, %v179
        %v479 = vpop.permute.xlu0 %478
        %v481 = vlaneseq
        %v482 = vshrl.u32 %v481, 7
        %v483 = vsub.s32 1, %v482
        %v484 = vrot.slane %v437, %v483
        %v485 = vlaneseq
        %v486 = vshrl.u32 %v485, 7
        %v487 = vsub.s32 5, %v486
        %v488 = vrot.slane %v437, %v487
        %v489 = vlaneseq
        %v490 = vshrl.u32 %v489, 7
        %v491 = vsub.s32 1, %v490
        %v492 = vrot.slane %v438, %v491
        %v496 = vlaneseq
        %v497 = vshrl.u32 %v496, 7
        %v498 = vsub.s32 1, %v497
        %v499 = vrot.slane %v484, %v498
        %v500 = vlaneseq
        %v501 = vshrl.u32 %v500, 7
        %v502 = vsub.s32 1, %v501
        %v503 = vrot.slane %v488, %v502
        %v504 = vlaneseq
        %v505 = vshrl.u32 %v504, 7
        %v506 = vsub.s32 1, %v505
        %v507 = vrot.slane %v492, %v506
        %v508 = vmul.f32 %v479, %v499
        %v509 = vmul.f32 %v479, %v503
        %v510 = vmul.f32 %v479, %v507
        %512 = vset.pattern.permute.xlu0 0
        %513 = vperm.xlu0 %512, %v180
        %v514 = vpop.permute.xlu0 %513
        %v516 = vlaneseq
        %v517 = vshrl.u32 %v516, 7
        %v518 = vsub.s32 2, %v517
        %v519 = vrot.slane %v437, %v518
        %v520 = vlaneseq
        %v521 = vshrl.u32 %v520, 7
        %v522 = vsub.s32 6, %v521
        %v523 = vrot.slane %v437, %v522
        %v524 = vlaneseq
        %v525 = vshrl.u32 %v524, 7
        %v526 = vsub.s32 2, %v525
        %v527 = vrot.slane %v438, %v526
        %v531 = vlaneseq
        %v532 = vshrl.u32 %v531, 7
        %v533 = vsub.s32 2, %v532
        %v534 = vrot.slane %v519, %v533
        %v535 = vlaneseq
        %v536 = vshrl.u32 %v535, 7
        %v537 = vsub.s32 2, %v536
        %v538 = vrot.slane %v523, %v537
        %v539 = vlaneseq
        %v540 = vshrl.u32 %v539, 7
        %v541 = vsub.s32 2, %v540
        %v542 = vrot.slane %v527, %v541
        %v543 = vmul.f32 %v514, %v534
        %v544 = vmul.f32 %v514, %v538
        %v545 = vmul.f32 %v514, %v542
        %v546 = vadd.f32 %v473, %v543
        %v547 = vadd.f32 %v474, %v544
        %v548 = vadd.f32 %v475, %v545
        %550 = vset.pattern.permute.xlu0 0
        %551 = vperm.xlu0 %550, %v181
        %v552 = vpop.permute.xlu0 %551
        %v554 = vlaneseq
        %v555 = vshrl.u32 %v554, 7
        %v556 = vsub.s32 3, %v555
        %v557 = vrot.slane %v437, %v556
        %v558 = vlaneseq
        %v559 = vshrl.u32 %v558, 7
        %v560 = vsub.s32 7, %v559
        %v561 = vrot.slane %v437, %v560
        %v562 = vlaneseq
        %v563 = vshrl.u32 %v562, 7
        %v564 = vsub.s32 3, %v563
        %v565 = vrot.slane %v438, %v564
        %v569 = vlaneseq
        %v570 = vshrl.u32 %v569, 7
        %v571 = vsub.s32 3, %v570
        %v572 = vrot.slane %v557, %v571
        %v573 = vlaneseq
        %v574 = vshrl.u32 %v573, 7
        %v575 = vsub.s32 3, %v574
        %v576 = vrot.slane %v561, %v575
        %v577 = vlaneseq
        %v578 = vshrl.u32 %v577, 7
        %v579 = vsub.s32 3, %v578
        %v580 = vrot.slane %v565, %v579
        %v581 = vmul.f32 %v552, %v572
        %v582 = vmul.f32 %v552, %v576
        %v583 = vmul.f32 %v552, %v580
        %v584 = vadd.f32 %v508, %v581
        %v585 = vadd.f32 %v509, %v582
        %v586 = vadd.f32 %v510, %v583
        %v587 = vadd.f32 %v546, %v584
        %v588 = vadd.f32 %v547, %v585
        %v589 = vadd.f32 %v548, %v586
        %590 = vst [vmem:[%s163] sm:$0xff] %v587
        %591 = vst [vmem:[%s163 + $0x8] sm:$0xff] %v588
        %592 = vst [vmem:[%s163 + $0x10] sm:$0xff] %v589
        %s593 = sand.u32 %s93, 1
        %s594 = scalar_lea.sflag [#allocation3], %s593
        %s595 = sand.u32 %s93, 1
        %s596 = smul.addr %s595, 24
        %s597 = scalar_lea.vmem [#allocation2], %s596
        // Predicated region
        $region33: #{tpu_custom_call.1} parent=31 // pred_check
          %p598 = pneg %p103
        $region34: #{tpu_custom_call.1} parent=31 // pred_check_branch
          %600 = sbr.rel (%p598) target = $region36
        $region35: #{tpu_custom_call.1} parent=31 // pred_region
          %s602 = ssub.s32 384, 384
          %603 = vsyncadd %s594, %s602
          %s604 = smul.addr %s17, 3
          %s605 = smul.addr %s604, 128
          %s606 = scalar_lea.hbm %s3, %s605
          %s608 = sshll.u32 %s597, 4
          %s609 = int_to_ptr.vmem [resolvable:$true] %s608
          %611 = dma.vmem_to_hbm [thread:$0]  %s609, 384, %s606, %s594
        $region36: #{tpu_custom_call.1} parent=31 // pred_fallthru
          _
      $region32: #{tpu_custom_call.1} parent=5 // pred_fallthru
        _
      %p612 = scmp.le.s32.totalorder 2, %s12
      // Predicated region
      $region37: #{tpu_custom_call.1} parent=5 // pred_check
        %p613 = pneg %p612
      $region38: #{tpu_custom_call.1} parent=5 // pred_check_branch
        %615 = sbr.rel (%p613) target = $region40
      $region39: #{tpu_custom_call.1} parent=5 // pred_region
        %s616 = ssub.s32 %s12, 2
        // Predicated region
        $region41: #{tpu_custom_call.1} parent=39 // pred_check
          %p617 = pneg %p109
        $region42: #{tpu_custom_call.1} parent=39 // pred_check_branch
          %619 = sbr.rel (%p617) target = $region44
        $region43: #{tpu_custom_call.1} parent=39 // pred_region
          %s620 = sand.u32 %s94, 1
          %s621 = scalar_lea.sflag [#allocation3], %s620
          %s622 = sand.u32 %s94, 1
          %s623 = smul.addr %s622, 24
          %s624 = scalar_lea.vmem [#allocation2], %s623
          %625 = dma.done %s621, 384
        $region44: #{tpu_custom_call.1} parent=39 // pred_fallthru
          _
      $region40: #{tpu_custom_call.1} parent=5 // pred_fallthru
        _
    $region6: #{tpu_custom_call.1} parent=1 // loop_footer
      %s16 = sadd.s32 1, %s12
    $region7: #{tpu_custom_call.1} parent=1 // loop_footer_branch
      %11 = sbr.rel target = $region3
    $region8: #{tpu_custom_call.1} parent=1 // loop_exit
      _
    %626 = vsyncpa [#allocation3], 1
    %s627 = scalar_lea.sflag [#allocation3], 1
    %628 = vsyncpa %s627, 1

</llo_original>
